<compile_context>
chip_gen: v5e
topology: v5e:2x2
jax: 0.10.0
libtpu: 0.0.40
codegen_flags: <defaults>
</compile_context>

<pallas_src>
import functools

import jax
import jax.numpy as jnp
from jax import lax
from jax.experimental import pallas as pl
from jax.experimental.pallas import tpu as pltpu


def _cluster_loss_kernel(e_ref, p_ref, out_ref, marg_acc, inter_acc, *,
                         n_total, block_n, epsilon):
    """One N-tile of the ClusterLoss reduction.

    e_ref     : [TN, D] embeddings tile (native dtype), streamed over the grid
    p_ref     : [K, D]  prototypes (VMEM-resident; constant index_map)
    out_ref   : SMEM (2,) f32 -> (inter_class_variances, entropy), last step only
    marg_acc  : VMEM [K, 1] f32 running sum of soft assignments per cluster
    inter_acc : VMEM [K, 1] f32 running sum of hard-assigned distances per cluster
    """
    step = pl.program_id(0)
    nsteps = pl.num_programs(0)

    @pl.when(step == 0)
    def _init():
        marg_acc[...] = jnp.zeros_like(marg_acc)
        inter_acc[...] = jnp.zeros_like(inter_acc)

    e_raw = e_ref[...]                       # [TN, D] native dtype
    p_raw = p_ref[...]                       # [K, D]
    tn = e_raw.shape[0]
    k = p_raw.shape[0]

    # cross[c, j] = <prototype_c, embedding_j> in a lane-dense [K, TN] layout (MXU).
    cross = lax.dot_general(
        p_raw, e_raw, (((1,), (1,)), ((), ())),
        preferred_element_type=jnp.float32,
        precision=lax.Precision.HIGHEST,
    )                                        # [K, TN] f32

    e = e_raw.astype(jnp.float32)
    p = p_raw.astype(jnp.float32)
    e_sq = jnp.sum(e * e, axis=1)[None, :]          # [1, TN]
    p_sq = jnp.sum(p * p, axis=1, keepdims=True)    # [K, 1]

    # compute_euclidean_dist: ||p||^2 + ||e||^2 - 2 <p, e>
    dists = p_sq + e_sq - 2.0 * cross               # [K, TN]

    needs_mask = (n_total % block_n) != 0
    if needs_mask:
        col = lax.broadcasted_iota(jnp.int32, (1, tn), 1)
        valid = (step * block_n + col) < n_total    # [1, TN] bool
        # Keep padded (out-of-range) columns finite; their contributions are
        # masked out of every reduction below.
        dists = jnp.where(valid, dists, jnp.float32(1.0))
    else:
        valid = None

    # sim = 1 / dists ; softmax over clusters (axis 0 = K, sublane reduction).
    # Exact divide (VPU) to mirror the torch semantics for the softmax input.
    sim = 1.0 / dists                               # [K, TN]
    col_max = jnp.max(sim, axis=0, keepdims=True)   # [1, TN]
    ex = jnp.exp(sim - col_max)                     # [K, TN] (EUP)
    denom = jnp.sum(ex, axis=0, keepdims=True)      # [1, TN]
    sim_soft = ex * pl.reciprocal(denom, approx=True)   # [K, TN]

    # Hard assignment: argmax over clusters with first-index tie-breaking.
    # softmax is strictly monotone per column, so argmax(sim) == argmax(sim_soft).
    k_iota = lax.broadcasted_iota(jnp.int32, (k, tn), 0)
    is_max = sim >= col_max
    assign = jnp.min(jnp.where(is_max, k_iota, jnp.int32(k)), axis=0, keepdims=True)
    assigned = k_iota == assign                     # [K, TN] boolean one-hot (never materialized in f32)

    if valid is not None:
        marg_contrib = jnp.where(valid, sim_soft, 0.0)
        inter_contrib = jnp.where(jnp.logical_and(valid, assigned), dists, 0.0)
    else:
        marg_contrib = sim_soft
        inter_contrib = jnp.where(assigned, dists, 0.0)

    marg_acc[...] += jnp.sum(marg_contrib, axis=1, keepdims=True)    # [K, 1]
    inter_acc[...] += jnp.sum(inter_contrib, axis=1, keepdims=True)  # [K, 1]

    @pl.when(step == nsteps - 1)
    def _finalize():
        # cluster_entropy_loss: entropy of the marginal cluster distribution.
        marginal = marg_acc[...] * jnp.float32(1.0 / n_total)        # [K, 1]
        entropy = -jnp.sum(marginal * jnp.log(marginal + jnp.float32(epsilon)))
        out_ref[0] = jnp.sum(inter_acc[...])    # inter_class_variances
        out_ref[1] = entropy


def cluster_loss_forward(embeddings, prototypes, *, epsilon=1e-07, block_n=1024):
    """Pallas implementation of ClusterLoss.forward.

    Returns (inter_class_variances, entropy) as f32 scalars.
    Accepts f32 or bf16 inputs (no wrapper-side cast; HBM traffic stays native).
    """
    n, d = embeddings.shape
    k, d2 = prototypes.shape
    assert d == d2, "feature dims must match"

    # Row-tile size: must be a multiple of 8 (sublane) unless it covers all rows.
    tn = min(block_n, n)
    if tn < n:
        tn = max(8, (tn // 8) * 8)
    grid = (pl.cdiv(n, tn),)

    kernel = functools.partial(
        _cluster_loss_kernel, n_total=n, block_n=tn, epsilon=float(epsilon))

    out = pl.pallas_call(
        kernel,
        out_shape=jax.ShapeDtypeStruct((2,), jnp.float32),
        grid=grid,
        in_specs=[
            pl.BlockSpec((tn, d), lambda i: (i, 0)),   # embeddings: streamed over N
            pl.BlockSpec((k, d), lambda i: (0, 0)),    # prototypes: VMEM-resident
        ],
        out_specs=pl.BlockSpec(memory_space=pltpu.MemorySpace.SMEM),
        scratch_shapes=[
            pltpu.VMEM((k, 1), jnp.float32),   # marginal (soft-assignment) accumulator
            pltpu.VMEM((k, 1), jnp.float32),   # per-cluster hard-assigned distance sum
        ],
        compiler_params=pltpu.CompilerParams(
            dimension_semantics=("arbitrary",),        # reduction over N (accumulators carry)
            vmem_limit_bytes=64 * 1024 * 1024,
        ),
    )(embeddings, prototypes)

    return out[0], out[1]


def _reference(embeddings, prototypes, epsilon=1e-07):
    """Pure-JAX reference mirroring the PyTorch semantics (for sanity check)."""
    e = embeddings.astype(jnp.float32)
    p = prototypes.astype(jnp.float32)
    cross = jnp.dot(e, p.T, precision=jax.lax.Precision.HIGHEST)
    dists = (jnp.sum(e ** 2, axis=1)[:, None]
             + jnp.sum(p ** 2, axis=1)[None, :]
             - 2.0 * cross)
    sim = 1.0 / dists
    sim_soft = jax.nn.softmax(sim, axis=1)
    one_hot = jax.nn.one_hot(jnp.argmax(sim_soft, axis=1), p.shape[0], dtype=jnp.float32)
    marginal = jnp.sum(sim_soft, axis=0) / e.shape[0]
    entropy = -jnp.sum(marginal * jnp.log(marginal + epsilon))
    inter = jnp.sum(one_hot * dists)
    return inter, entropy


if __name__ == "__main__":
    key = jax.random.PRNGKey(0)
    k_e, k_p = jax.random.split(key)

    num_clusters = 4
    N, D = 200, 32
    embeddings = jax.random.normal(k_e, (N, D), dtype=jnp.float32)
    prototypes = jax.random.normal(k_p, (num_clusters, D), dtype=jnp.float32)

    # Tiled path with a partial (masked) last block: grid = ceil(200/64) = 4.
    inter, ent = cluster_loss_forward(embeddings, prototypes, block_n=64)
    jax.block_until_ready((inter, ent))
    inter_ref, ent_ref = _reference(embeddings, prototypes)
    assert jnp.allclose(inter, inter_ref, rtol=2e-3, atol=2e-3), (inter, inter_ref)
    assert jnp.allclose(ent, ent_ref, rtol=2e-3, atol=2e-3), (ent, ent_ref)

    # Evenly-divided path (no masking): grid = 256/128 = 2.
    N2 = 256
    embeddings2 = jax.random.normal(k_e, (N2, D), dtype=jnp.float32)
    inter2, ent2 = cluster_loss_forward(embeddings2, prototypes, block_n=128)
    jax.block_until_ready((inter2, ent2))
    inter2_ref, ent2_ref = _reference(embeddings2, prototypes)
    assert jnp.allclose(inter2, inter2_ref, rtol=2e-3, atol=2e-3), (inter2, inter2_ref)
    assert jnp.allclose(ent2, ent2_ref, rtol=2e-3, atol=2e-3), (ent2, ent2_ref)

    # Single-block path (no grid loop): whole array in one tile.
    inter3, ent3 = cluster_loss_forward(embeddings, prototypes, block_n=1024)
    jax.block_until_ready((inter3, ent3))
    assert jnp.allclose(inter3, inter_ref, rtol=2e-3, atol=2e-3), (inter3, inter_ref)
    assert jnp.allclose(ent3, ent_ref, rtol=2e-3, atol=2e-3), (ent3, ent_ref)

    print("KERNEL_OK")
</pallas_src>

<mosaic_0001>
module attributes {stable_mosaic.version = 11 : i64} {
  func.func @_cluster_loss_kernel(%arg0: i32, %arg1: memref<64x32xf32, #tpu.memory_space<vmem>>, %arg2: memref<4x32xf32, #tpu.memory_space<vmem>>, %arg3: memref<2xf32, #tpu.memory_space<smem>>, %arg4: memref<4x1xf32, #tpu.memory_space<vmem>>, %arg5: memref<4x1xf32, #tpu.memory_space<vmem>>) attributes {dimension_semantics = [#tpu.dimension_semantics<arbitrary>], iteration_bounds = array<i64: 4>, scalar_prefetch = 0 : i64, scratch_operands = 2 : i64, tpu.core_type = #tpu.core_type<tc>, window_params = [{transform_indices = @transform_0, window_bounds = array<i64: 64, 32>}, {pipeline_mode = #tpu.pipeline_mode<synchronous>, transform_indices = @transform_1, window_bounds = array<i64: 4, 32>}, {transform_indices = @transform_2, window_bounds = array<i64: 2>}]} {
    %c0_i32 = arith.constant 0 : i32
    %0 = arith.cmpi eq, %arg0, %c0_i32 : i32
    %1 = arith.extui %0 : i1 to i32
    %c0_i32_0 = arith.constant 0 : i32
    %2 = arith.cmpi ne, %1, %c0_i32_0 : i32
    scf.if %2 {
      %cst_25 = arith.constant 0.000000e+00 : f32
      %70 = vector.broadcast %cst_25 : f32 to vector<4x1xf32>
      %c0_26 = arith.constant 0 : index
      %c0_27 = arith.constant 0 : index
      %71 = vector.load %arg4[%c0_26, %c0_27] : memref<4x1xf32, #tpu.memory_space<vmem>>, vector<4x1xf32>
      tpu.vector_store %arg4[%c0_26, %c0_27], %70 {strides = array<i32>} : memref<4x1xf32, #tpu.memory_space<vmem>>, vector<4x1xf32>,
      %cst_28 = arith.constant 0.000000e+00 : f32
      %72 = vector.broadcast %cst_28 : f32 to vector<4x1xf32>
      %c0_29 = arith.constant 0 : index
      %c0_30 = arith.constant 0 : index
      %73 = vector.load %arg5[%c0_29, %c0_30] : memref<4x1xf32, #tpu.memory_space<vmem>>, vector<4x1xf32>
      tpu.vector_store %arg5[%c0_29, %c0_30], %72 {strides = array<i32>} : memref<4x1xf32, #tpu.memory_space<vmem>>, vector<4x1xf32>,
    } else {
    }
    %c0 = arith.constant 0 : index
    %c0_1 = arith.constant 0 : index
    %3 = vector.load %arg1[%c0, %c0_1] : memref<64x32xf32, #tpu.memory_space<vmem>>, vector<64x32xf32>
    %c0_2 = arith.constant 0 : index
    %c0_3 = arith.constant 0 : index
    %4 = vector.load %arg2[%c0_2, %c0_3] : memref<4x32xf32, #tpu.memory_space<vmem>>, vector<4x32xf32>
    %cst = arith.constant dense<0.000000e+00> : vector<4x64xf32>
    %5 = tpu.matmul %4, %3, %cst {dimension_numbers = #tpu.dot_dimension_numbers<[1], [1], [0], [0], [0, 0, 1, 0], [], []>, precision = #tpu.contract_precision<fp32>} : vector<4x32xf32>, vector<64x32xf32>, vector<4x64xf32> -> vector<4x64xf32>
    %6 = arith.mulf %3, %3 : vector<64x32xf32>
    %cst_4 = arith.constant dense<0.000000e+00> : vector<64xf32>
    %7 = vector.multi_reduction <add>, %6, %cst_4 [1] : vector<64x32xf32> to vector<64xf32>
    %8 = vector.shape_cast %7 : vector<64xf32> to vector<1x64xf32>
    %9 = arith.mulf %4, %4 : vector<4x32xf32>
    %cst_5 = arith.constant dense<0.000000e+00> : vector<4xf32>
    %10 = vector.multi_reduction <add>, %9, %cst_5 [1] : vector<4x32xf32> to vector<4xf32>
    %11 = vector.shape_cast %10 : vector<4xf32> to vector<4x1xf32>
    %12 = vector.broadcast %11 : vector<4x1xf32> to vector<4x64xf32>
    %13 = vector.broadcast %8 : vector<1x64xf32> to vector<4x64xf32>
    %14 = arith.addf %12, %13 : vector<4x64xf32>
    %cst_6 = arith.constant 2.000000e+00 : f32
    %15 = vector.broadcast %cst_6 : f32 to vector<4x64xf32>
    %16 = arith.mulf %15, %5 : vector<4x64xf32>
    %17 = arith.subf %14, %16 : vector<4x64xf32>
    %18 = tpu.iota {dimensions = array<i32: 1>} : vector<1x64xi32>
    %c64_i32 = arith.constant 64 : i32
    %19 = arith.muli %arg0, %c64_i32 : i32
    %20 = vector.broadcast %19 : i32 to vector<1x64xi32>
    %21 = arith.addi %20, %18 : vector<1x64xi32>
    %c200_i32 = arith.constant 200 : i32
    %22 = vector.broadcast %c200_i32 : i32 to vector<1x64xi32>
    %23 = arith.cmpi slt, %21, %22 : vector<1x64xi32>
    %cst_7 = arith.constant 1.000000e+00 : f32
    %24 = vector.shape_cast %23 : vector<1x64xi1> to vector<1x64xi1>
    %25 = vector.broadcast %24 : vector<1x64xi1> to vector<4x64xi1>
    %26 = vector.broadcast %cst_7 : f32 to vector<4x64xf32>
    %27 = arith.select %25, %17, %26 : vector<4x64xi1>, vector<4x64xf32>
    %cst_8 = arith.constant 1.000000e+00 : f32
    %28 = vector.broadcast %cst_8 : f32 to vector<4x64xf32>
    %29 = arith.divf %28, %27 : vector<4x64xf32>
    %cst_9 = arith.constant dense<0xFF800000> : vector<64xf32>
    %30 = vector.multi_reduction <maximumf>, %29, %cst_9 [0] : vector<4x64xf32> to vector<64xf32>
    %31 = vector.shape_cast %30 : vector<64xf32> to vector<1x64xf32>
    %32 = vector.broadcast %31 : vector<1x64xf32> to vector<4x64xf32>
    %33 = arith.subf %29, %32 : vector<4x64xf32>
    %34 = math.exp %33 : vector<4x64xf32>
    %cst_10 = arith.constant dense<0.000000e+00> : vector<64xf32>
    %35 = vector.multi_reduction <add>, %34, %cst_10 [0] : vector<4x64xf32> to vector<64xf32>
    %36 = vector.shape_cast %35 : vector<64xf32> to vector<1x64xf32>
    %37 = tpu.reciprocal %36 {approx = true} : vector<1x64xf32> -> vector<1x64xf32>
    %38 = vector.broadcast %37 : vector<1x64xf32> to vector<4x64xf32>
    %39 = arith.mulf %34, %38 : vector<4x64xf32>
    %40 = tpu.iota {dimensions = array<i32: 0>} : vector<4x64xi32>
    %41 = vector.broadcast %31 : vector<1x64xf32> to vector<4x64xf32>
    %42 = arith.cmpf oge, %29, %41 : vector<4x64xf32>
    %c4_i32 = arith.constant 4 : i32
    %43 = vector.broadcast %c4_i32 : i32 to vector<4x64xi32>
    %44 = arith.select %42, %40, %43 : vector<4x64xi1>, vector<4x64xi32>
    %cst_11 = arith.constant dense<2147483647> : vector<64xi32>
    %45 = vector.multi_reduction <minsi>, %44, %cst_11 [0] : vector<4x64xi32> to vector<64xi32>
    %46 = vector.shape_cast %45 : vector<64xi32> to vector<1x64xi32>
    %47 = vector.broadcast %46 : vector<1x64xi32> to vector<4x64xi32>
    %48 = arith.cmpi eq, %40, %47 : vector<4x64xi32>
    %cst_12 = arith.constant 0.000000e+00 : f32
    %49 = vector.shape_cast %23 : vector<1x64xi1> to vector<1x64xi1>
    %50 = vector.broadcast %49 : vector<1x64xi1> to vector<4x64xi1>
    %51 = vector.broadcast %cst_12 : f32 to vector<4x64xf32>
    %52 = arith.select %50, %39, %51 : vector<4x64xi1>, vector<4x64xf32>
    %53 = vector.broadcast %23 : vector<1x64xi1> to vector<4x64xi1>
    %54 = arith.andi %53, %48 : vector<4x64xi1>
    %cst_13 = arith.constant 0.000000e+00 : f32
    %55 = vector.broadcast %cst_13 : f32 to vector<4x64xf32>
    %56 = arith.select %54, %27, %55 : vector<4x64xi1>, vector<4x64xf32>
    %c0_14 = arith.constant 0 : index
    %c0_15 = arith.constant 0 : index
    %57 = vector.load %arg4[%c0_14, %c0_15] : memref<4x1xf32, #tpu.memory_space<vmem>>, vector<4x1xf32>
    %cst_16 = arith.constant dense<0.000000e+00> : vector<4xf32>
    %58 = vector.multi_reduction <add>, %52, %cst_16 [1] : vector<4x64xf32> to vector<4xf32>
    %59 = vector.shape_cast %58 : vector<4xf32> to vector<4x1xf32>
    %60 = arith.addf %57, %59 : vector<4x1xf32>
    %c0_17 = arith.constant 0 : index
    %c0_18 = arith.constant 0 : index
    %61 = vector.load %arg4[%c0_17, %c0_18] : memref<4x1xf32, #tpu.memory_space<vmem>>, vector<4x1xf32>
    tpu.vector_store %arg4[%c0_17, %c0_18], %60 {strides = array<i32>} : memref<4x1xf32, #tpu.memory_space<vmem>>, vector<4x1xf32>,
    %c0_19 = arith.constant 0 : index
    %c0_20 = arith.constant 0 : index
    %62 = vector.load %arg5[%c0_19, %c0_20] : memref<4x1xf32, #tpu.memory_space<vmem>>, vector<4x1xf32>
    %cst_21 = arith.constant dense<0.000000e+00> : vector<4xf32>
    %63 = vector.multi_reduction <add>, %56, %cst_21 [1] : vector<4x64xf32> to vector<4xf32>
    %64 = vector.shape_cast %63 : vector<4xf32> to vector<4x1xf32>
    %65 = arith.addf %62, %64 : vector<4x1xf32>
    %c0_22 = arith.constant 0 : index
    %c0_23 = arith.constant 0 : index
    %66 = vector.load %arg5[%c0_22, %c0_23] : memref<4x1xf32, #tpu.memory_space<vmem>>, vector<4x1xf32>
    tpu.vector_store %arg5[%c0_22, %c0_23], %65 {strides = array<i32>} : memref<4x1xf32, #tpu.memory_space<vmem>>, vector<4x1xf32>,
    %c3_i32 = arith.constant 3 : i32
    %67 = arith.cmpi eq, %arg0, %c3_i32 : i32
    %68 = arith.extui %67 : i1 to i32
    %c0_i32_24 = arith.constant 0 : i32
    %69 = arith.cmpi ne, %68, %c0_i32_24 : i32
    scf.if %69 {
      %c0_25 = arith.constant 0 : index
      %c0_26 = arith.constant 0 : index
      %70 = vector.load %arg4[%c0_25, %c0_26] : memref<4x1xf32, #tpu.memory_space<vmem>>, vector<4x1xf32>
      %cst_27 = arith.constant 5.000000e-03 : f32
      %71 = vector.broadcast %cst_27 : f32 to vector<4x1xf32>
      %72 = arith.mulf %70, %71 : vector<4x1xf32>
      %cst_28 = arith.constant 1.000000e-07 : f32
      %73 = vector.broadcast %cst_28 : f32 to vector<4x1xf32>
      %74 = arith.addf %72, %73 : vector<4x1xf32>
      %75 = math.log %74 : vector<4x1xf32>
      %76 = arith.mulf %72, %75 : vector<4x1xf32>
      %77 = vector.shape_cast %76 : vector<4x1xf32> to vector<1x4x1xf32>
      %cst_29 = arith.constant dense<0.000000e+00> : vector<1xf32>
      %78 = vector.multi_reduction <add>, %77, %cst_29 [1, 2] : vector<1x4x1xf32> to vector<1xf32>
      %79 = vector.shape_cast %78 : vector<1xf32> to vector<1x1x1xf32>
      %80 = vector.extract %79[0, 0, 0] : f32 from vector<1x1x1xf32>
      %cst_30 = arith.constant 0.000000e+00 : f32
      %81 = arith.subf %cst_30, %80 : f32
      %c0_31 = arith.constant 0 : index
      %c0_32 = arith.constant 0 : index
      %82 = vector.load %arg5[%c0_31, %c0_32] : memref<4x1xf32, #tpu.memory_space<vmem>>, vector<4x1xf32>
      %83 = vector.shape_cast %82 : vector<4x1xf32> to vector<1x4x1xf32>
      %cst_33 = arith.constant dense<0.000000e+00> : vector<1xf32>
      %84 = vector.multi_reduction <add>, %83, %cst_33 [1, 2] : vector<1x4x1xf32> to vector<1xf32>
      %85 = vector.shape_cast %84 : vector<1xf32> to vector<1x1x1xf32>
      %86 = vector.extract %85[0, 0, 0] : f32 from vector<1x1x1xf32>
      %c0_34 = arith.constant 0 : index
      %87 = memref.load %arg3[%c0_34] : memref<2xf32, #tpu.memory_space<smem>>
      memref.store %86, %arg3[%c0_34] : memref<2xf32, #tpu.memory_space<smem>>
      %c1 = arith.constant 1 : index
      %88 = memref.load %arg3[%c1] : memref<2xf32, #tpu.memory_space<smem>>
      memref.store %81, %arg3[%c1] : memref<2xf32, #tpu.memory_space<smem>>
    } else {
    }
    return
  }
  func.func @transform_0(%arg0: i32) -> (i32, i32) {
    %c0_i32 = arith.constant 0 : i32
    %c0_i32_0 = arith.constant 0 : i32
    return %arg0, %c0_i32 : i32, i32
  }
  func.func @transform_1(%arg0: i32) -> (i32, i32) {
    %c0_i32 = arith.constant 0 : i32
    %c0_i32_0 = arith.constant 0 : i32
    %c0_i32_1 = arith.constant 0 : i32
    return %c0_i32, %c0_i32_0 : i32, i32
  }
  func.func @transform_2(%arg0: i32) -> i32 {
    %c0_i32 = arith.constant 0 : i32
    %c0_i32_0 = arith.constant 0 : i32
    return %c0_i32 : i32
  }
}

</mosaic_0001>

<llo_original>
// kernel: tpu_custom_call.1
$region0: #{tpu_custom_call.1}
  #allocation0 [shape = 'u32[]', space=smem, size = 0x4, offset = 0x4, fixed_abs, tag = 'smem constant byte address 0x4 - core index']
  #allocation1 [shape = 'u32[72,128]{1,0:T(1,128)}', space=vmem, size = 0x9000, scoped, tag = 'internal scratch']
  #allocation2 [shape = 'f32[4,1]{1,0:T(4,128)}', space=vmem, size = 0x800, scoped, tag = 'scratch operand']
  #allocation3 [shape = 'f32[4,1]{1,0:T(4,128)}', space=vmem, size = 0x800, scoped, tag = 'scratch operand']
  %s0 = inlined_call_operand.vmem [shape: f32[200,32], index: 0, kind: input, shape index: {}]
  %s1 = inlined_call_operand.vmem [shape: f32[4,32], index: 1, kind: input, shape index: {}]
  %s2 = inlined_call_operand.hbm [shape: f32[2], index: 2, kind: output, shape index: {}]
  %s3 = sld [smem:[#allocation0]]
  $region49: #{tpu_custom_call.1} parent=0
    _
  %s5 = ssub.s32 1, %s3
  %s6 = scalar_select 0, %s5, %s3
  $region1: #{tpu_custom_call.1} parent=0
    #allocation4 [shape = 'u8[512]{0}', space=smem, size = 0x200, scoped, tag = 'output window, operand 0, single buffered']
    #allocation5 [shape = 's32[2]{0}', space=sflag, size = 0x8, scoped, tag = 'scoped memory for tpu_custom_call.1']
    %7 = vsyncpa [#allocation5], 0
    loop: start=0, step=1, limit=6
    $region2: #{tpu_custom_call.1} parent=1 // loop_pre_header
      _
    $region3: #{tpu_custom_call.1} parent=1 // loop_header
      %s9 = sphi 0, %s13
      %p10 = scmp.ge.s32.totalorder %s9, 6
      %s19 = sphi 0, %s21
      %s22 = sphi 0, %s19
      %s23 = sphi 0, %s22
      %s39 = sphi 0, %s23
      %s43 = sphi 0, %s43
      %s45 = sphi 0, %s43
      %s46 = sphi 0, %s45
      %s60 = sphi 0, %s46
      %s64 = sphi 0, %s64
      %s66 = sphi 0, %s64
      %s67 = sphi 0, %s66
      %s81 = sphi 0, %s67
    $region4: #{tpu_custom_call.1} parent=1 // loop_header_branch
      %12 = sbr.rel (%p10) target = $region8
    $region5: #{tpu_custom_call.1} parent=1 // loop_body
      %s14 = ssub.s32 %s9, 1
      %s15 = ssub.s32 %s9, 2
      %s16 = sadd.s32 %s9, 1
      %s17 = ssub.s32 %s9, %s16
      %p18 = scmp.eq.s32.totalorder %s17, 0
      %s20 = sadd.s32 %s19, 1
      %s21 = scalar_select %p18, %s19, %s20
      %p24 = pneg %p18
      %p25 = scmp.eq.s32.totalorder %s9, 3
      %p26 = por %p24, %p25
      %p27 = scmp.ne.s32.totalorder %s19, %s22
      %p28 = scmp.eq.s32.totalorder %s9, 0
      %p29 = por %p27, %p28
      %p30 = scmp.ne.s32.totalorder %s19, %s22
      %p31 = scmp.eq.s32.totalorder %s14, 3
      %p32 = por %p30, %p31
      %p33 = scmp.ne.s32.totalorder %s22, %s23
      %p34 = scmp.eq.s32.totalorder %s14, 0
      %p35 = por %p33, %p34
      %p36 = scmp.ne.s32.totalorder %s22, %s23
      %p37 = scmp.eq.s32.totalorder %s15, 3
      %p38 = por %p36, %p37
      %p40 = scmp.ne.s32.totalorder %s23, %s39
      %p41 = scmp.eq.s32.totalorder %s15, 0
      %p42 = por %p40, %p41
      %s44 = sadd.s32 %s43, 1
      %p47 = scmp.eq.s32.totalorder %s9, 3
      %p48 = scmp.ne.s32.totalorder %s43, %s45
      %p49 = scmp.eq.s32.totalorder %s9, 0
      %p50 = por %p48, %p49
      %p51 = scmp.ne.s32.totalorder %s43, %s45
      %p52 = scmp.eq.s32.totalorder %s14, 3
      %p53 = por %p51, %p52
      %p54 = scmp.ne.s32.totalorder %s45, %s46
      %p55 = scmp.eq.s32.totalorder %s14, 0
      %p56 = por %p54, %p55
      %p57 = scmp.ne.s32.totalorder %s45, %s46
      %p58 = scmp.eq.s32.totalorder %s15, 3
      %p59 = por %p57, %p58
      %p61 = scmp.ne.s32.totalorder %s46, %s60
      %p62 = scmp.eq.s32.totalorder %s15, 0
      %p63 = por %p61, %p62
      %s65 = sadd.s32 %s64, 1
      %p68 = scmp.eq.s32.totalorder %s9, 3
      %p69 = scmp.ne.s32.totalorder %s64, %s66
      %p70 = scmp.eq.s32.totalorder %s9, 0
      %p71 = por %p69, %p70
      %p72 = scmp.ne.s32.totalorder %s64, %s66
      %p73 = scmp.eq.s32.totalorder %s14, 3
      %p74 = por %p72, %p73
      %p75 = scmp.ne.s32.totalorder %s66, %s67
      %p76 = scmp.eq.s32.totalorder %s14, 0
      %p77 = por %p75, %p76
      %p78 = scmp.ne.s32.totalorder %s66, %s67
      %p79 = scmp.eq.s32.totalorder %s15, 3
      %p80 = por %p78, %p79
      %p82 = scmp.ne.s32.totalorder %s67, %s81
      %p83 = scmp.eq.s32.totalorder %s15, 0
      %p84 = por %p82, %p83
      %p85 = scmp.le.s32.totalorder 1, %s9
      %p86 = scmp.lt.s32.totalorder %s9, 5
      %p87 = pnand %p85, %p86
      %p88 = pneg %p87
      // Predicated region
      $region9: #{tpu_custom_call.1} parent=5 // pred_check
        _
      $region10: #{tpu_custom_call.1} parent=5 // pred_check_branch
        %90 = sbr.rel (%p87) target = $region12
      $region11: #{tpu_custom_call.1} parent=5 // pred_region
        %s91 = ssub.s32 %s9, 1
        // Predicated region
        $region13: #{tpu_custom_call.1} parent=11 // pred_check
          %p92 = pneg %p56
        $region14: #{tpu_custom_call.1} parent=11 // pred_check_branch
          %94 = sbr.rel (%p92) target = $region16
        $region15: #{tpu_custom_call.1} parent=11 // pred_region
          _
        $region16: #{tpu_custom_call.1} parent=11 // pred_fallthru
          _
      $region12: #{tpu_custom_call.1} parent=5 // pred_fallthru
        _
      %p95 = scmp.lt.s32.totalorder %s9, 4
      // Predicated region
      $region17: #{tpu_custom_call.1} parent=5 // pred_check
        %p96 = pneg %p95
      $region18: #{tpu_custom_call.1} parent=5 // pred_check_branch
        %98 = sbr.rel (%p96) target = $region20
      $region19: #{tpu_custom_call.1} parent=5 // pred_region
        // Predicated region
        $region21: #{tpu_custom_call.1} parent=19 // pred_check
          %p99 = pneg %p29
        $region22: #{tpu_custom_call.1} parent=19 // pred_check_branch
          %101 = sbr.rel (%p99) target = $region24
        $region23: #{tpu_custom_call.1} parent=19 // pred_region
          %s102 = smul.u32 8, %s9
          %s103 = ssub.s32 25, %s102
          %p104 = scmp.lt.s32.totalorder %s103, 8
          %s105 = scalar_select %p104, %s103, 8
          %s106 = smul.u32 8, %s105
          %p107 = scmp.lt.s32.totalorder %s102, 24
          %s108 = scalar_select %p107, %s102, 24
          %s109 = smul.addr %s108, 8
          %s110 = scalar_lea.vmem %s0, %s109
          %s111 = smul.u32 8, %s9
          %s112 = ssub.s32 25, %s111
          %p113 = scmp.lt.s32.totalorder %s112, 8
          %s114 = scalar_select %p113, %s112, 8
          %s115 = smul.u32 8, %s114
        $region24: #{tpu_custom_call.1} parent=19 // pred_fallthru
          _
      $region20: #{tpu_custom_call.1} parent=5 // pred_fallthru
        _
      %p116 = scmp.le.s32.totalorder 1, %s9
      %p117 = scmp.lt.s32.totalorder %s9, 5
      %p118 = pnand %p116, %p117
      %p119 = pneg %p118
      // Predicated region
      $region25: #{tpu_custom_call.1} parent=5 // pred_check
        _
      $region26: #{tpu_custom_call.1} parent=5 // pred_check_branch
        %121 = sbr.rel (%p118) target = $region28
      $region27: #{tpu_custom_call.1} parent=5 // pred_region
        %s122 = ssub.s32 %s9, 1
        %s123 = smul.u32 8, %s14
        %s124 = ssub.s32 25, %s123
        %p125 = scmp.lt.s32.totalorder %s124, 8
        %s126 = scalar_select %p125, %s124, 8
        %s127 = smul.u32 8, %s126
        %p128 = scmp.lt.s32.totalorder %s123, 24
        %s129 = scalar_select %p128, %s123, 24
        %s130 = smul.addr %s129, 8
        %s131 = scalar_lea.vmem %s0, %s130
        %p132 = pneg %p35
        %p133 = pneg %p32
        %p134 = pneg %p56
        %p135 = pneg %p53
        %p136 = pneg %p77
        %p137 = pneg %p74
        %s138 = smul.u32 8, %s14
        %s139 = ssub.s32 25, %s138
        %p140 = scmp.lt.s32.totalorder %s139, 8
        %s141 = scalar_select %p140, %s139, 8
        %s142 = smul.u32 8, %s141
        %p143 = scmp.lt.s32.totalorder %s138, 24
        %s144 = scalar_select %p143, %s138, 24
        %s145 = smul.addr %s144, 8
        %s146 = scalar_lea.vmem %s0, %s145
        %s147 = smul.u32 8, %s14
        %s148 = ssub.s32 25, %s147
        %p149 = scmp.lt.s32.totalorder %s148, 8
        %s150 = scalar_select %p149, %s148, 8
        %s151 = smul.u32 8, %s150
        %p152 = scmp.eq.s32.totalorder %s14, 0
        // Predicated region
        $region29: #{tpu_custom_call.1} parent=27 // pred_check
          %p153 = pneg %p152
        $region30: #{tpu_custom_call.1} parent=27 // pred_check_branch
          %155 = sbr.rel (%p153) target = $region32
        $region31: #{tpu_custom_call.1} parent=27 // pred_region
          %vm156 = vcmask 3072
          %157 = vst.msk [vmem:[#allocation2] sm:$0xf] %vm156, 0.0
          %158 = vst.msk [vmem:[#allocation3] sm:$0xf] %vm156, 0.0
        $region32: #{tpu_custom_call.1} parent=27 // pred_fallthru
          _
        %v159 = vld [vmem:[%s146] sm:$0xff]
        %v160 = vld [vmem:[%s146 + $0x8] sm:$0xff]
        %v161 = vld [vmem:[%s146 + $0x10] sm:$0xff]
        %v162 = vld [vmem:[%s146 + $0x18] sm:$0xff]
        %v163 = vld [vmem:[%s146 + $0x20] sm:$0xff]
        %v164 = vld [vmem:[%s146 + $0x28] sm:$0xff]
        %v165 = vld [vmem:[%s146 + $0x30] sm:$0xff]
        %v166 = vld [vmem:[%s146 + $0x38] sm:$0xff]
        %v167 = vld [vmem:[%s1] sm:$0xf]
        %vm168 = vcmask 261120
        %v170 = vsel %vm168, %v167, 0
        %v173 = vsel %vm168, %v159, 0
        %v176 = vsel %vm168, %v160, 0
        %v179 = vsel %vm168, %v161, 0
        %v182 = vsel %vm168, %v162, 0
        %v185 = vsel %vm168, %v163, 0
        %v188 = vsel %vm168, %v164, 0
        %v191 = vsel %vm168, %v165, 0
        %v194 = vsel %vm168, %v166, 0
        %196 = vmatpush.xpose.msra.mxu0 0.0
        %197 = vmatpush.xpose.msra.mxu0 0.0
        %198 = vmatpush.xpose.msra.mxu0 0.0
        %199 = vmatpush.xpose.msra.mxu0 0.0
        %200 = vmatpush.xpose.msra.mxu0 0.0
        %201 = vmatpush.xpose.msra.mxu0 0.0
        %202 = vmatpush.xpose.msra.mxu0 0.0
        %203 = vmatpush.xpose.msra.mxu0 0.0
        %v204 = vand.u32 %v194, 4294901760
        %205 = vmatpush.xpose.msra.mxu0 %v204
        %v206 = vand.u32 %v191, 4294901760
        %207 = vmatpush.xpose.msra.mxu0 %v206
        %v208 = vand.u32 %v188, 4294901760
        %209 = vmatpush.xpose.msra.mxu0 %v208
        %v210 = vand.u32 %v185, 4294901760
        %211 = vmatpush.xpose.msra.mxu0 %v210
        %v212 = vand.u32 %v182, 4294901760
        %213 = vmatpush.xpose.msra.mxu0 %v212
        %v214 = vand.u32 %v179, 4294901760
        %215 = vmatpush.xpose.msra.mxu0 %v214
        %v216 = vand.u32 %v176, 4294901760
        %217 = vmatpush.xpose.msra.mxu0 %v216
        %v218 = vand.u32 %v173, 4294901760
        %219 = vmatpush.xpose.msra.mxu0 %v218
        %v220 = vand.u32 %v170, 4294901760
        %v221 = vsub.f32 %v170, %v220
        %v222 = vand.u32 %v221, 4294901760
        %v223 = vsub.f32 %v221, %v222
        %v224 = vand.u32 %v223, 4294901760
        %225 = vmatmul.f32.gmra.mxu0 %v224
        %v226 = vpop.f32.mrf.mxu0
        %v227 = vadd.f32 0.0, %v226
        %228 = vdwg.mxu0
        %229 = vmatpush.xpose.msra.mxu0 0.0
        %230 = vmatpush.xpose.msra.mxu0 0.0
        %231 = vmatpush.xpose.msra.mxu0 0.0
        %232 = vmatpush.xpose.msra.mxu0 0.0
        %233 = vmatpush.xpose.msra.mxu0 0.0
        %234 = vmatpush.xpose.msra.mxu0 0.0
        %235 = vmatpush.xpose.msra.mxu0 0.0
        %236 = vmatpush.xpose.msra.mxu0 0.0
        %v237 = vand.u32 %v194, 4294901760
        %v238 = vsub.f32 %v194, %v237
        %v239 = vand.u32 %v238, 4294901760
        %v240 = vsub.f32 %v238, %v239
        %v241 = vand.u32 %v240, 4294901760
        %242 = vmatpush.xpose.msra.mxu0 %v241
        %v243 = vand.u32 %v191, 4294901760
        %v244 = vsub.f32 %v191, %v243
        %v245 = vand.u32 %v244, 4294901760
        %v246 = vsub.f32 %v244, %v245
        %v247 = vand.u32 %v246, 4294901760
        %248 = vmatpush.xpose.msra.mxu0 %v247
        %v249 = vand.u32 %v188, 4294901760
        %v250 = vsub.f32 %v188, %v249
        %v251 = vand.u32 %v250, 4294901760
        %v252 = vsub.f32 %v250, %v251
        %v253 = vand.u32 %v252, 4294901760
        %254 = vmatpush.xpose.msra.mxu0 %v253
        %v255 = vand.u32 %v185, 4294901760
        %v256 = vsub.f32 %v185, %v255
        %v257 = vand.u32 %v256, 4294901760
        %v258 = vsub.f32 %v256, %v257
        %v259 = vand.u32 %v258, 4294901760
        %260 = vmatpush.xpose.msra.mxu0 %v259
        %v261 = vand.u32 %v182, 4294901760
        %v262 = vsub.f32 %v182, %v261
        %v263 = vand.u32 %v262, 4294901760
        %v264 = vsub.f32 %v262, %v263
        %v265 = vand.u32 %v264, 4294901760
        %266 = vmatpush.xpose.msra.mxu0 %v265
        %v267 = vand.u32 %v179, 4294901760
        %v268 = vsub.f32 %v179, %v267
        %v269 = vand.u32 %v268, 4294901760
        %v270 = vsub.f32 %v268, %v269
        %v271 = vand.u32 %v270, 4294901760
        %272 = vmatpush.xpose.msra.mxu0 %v271
        %v273 = vand.u32 %v176, 4294901760
        %v274 = vsub.f32 %v176, %v273
        %v275 = vand.u32 %v274, 4294901760
        %v276 = vsub.f32 %v274, %v275
        %v277 = vand.u32 %v276, 4294901760
        %278 = vmatpush.xpose.msra.mxu0 %v277
        %v279 = vand.u32 %v173, 4294901760
        %v280 = vsub.f32 %v173, %v279
        %v281 = vand.u32 %v280, 4294901760
        %v282 = vsub.f32 %v280, %v281
        %v283 = vand.u32 %v282, 4294901760
        %284 = vmatpush.xpose.msra.mxu0 %v283
        %v285 = vand.u32 %v170, 4294901760
        %286 = vmatmul.f32.gmra.mxu0 %v285
        %v287 = vpop.f32.mrf.mxu0
        %v288 = vadd.f32 %v227, %v287
        %289 = vdwg.mxu0
        %290 = vmatpush.xpose.msra.mxu0 0.0
        %291 = vmatpush.xpose.msra.mxu0 0.0
        %292 = vmatpush.xpose.msra.mxu0 0.0
        %293 = vmatpush.xpose.msra.mxu0 0.0
        %294 = vmatpush.xpose.msra.mxu0 0.0
        %295 = vmatpush.xpose.msra.mxu0 0.0
        %296 = vmatpush.xpose.msra.mxu0 0.0
        %297 = vmatpush.xpose.msra.mxu0 0.0
        %v298 = vand.u32 %v194, 4294901760
        %v299 = vsub.f32 %v194, %v298
        %300 = vmatpush.xpose.msra.mxu0 %v299
        %v301 = vand.u32 %v191, 4294901760
        %v302 = vsub.f32 %v191, %v301
        %303 = vmatpush.xpose.msra.mxu0 %v302
        %v304 = vand.u32 %v188, 4294901760
        %v305 = vsub.f32 %v188, %v304
        %306 = vmatpush.xpose.msra.mxu0 %v305
        %v307 = vand.u32 %v185, 4294901760
        %v308 = vsub.f32 %v185, %v307
        %309 = vmatpush.xpose.msra.mxu0 %v308
        %v310 = vand.u32 %v182, 4294901760
        %v311 = vsub.f32 %v182, %v310
        %312 = vmatpush.xpose.msra.mxu0 %v311
        %v313 = vand.u32 %v179, 4294901760
        %v314 = vsub.f32 %v179, %v313
        %315 = vmatpush.xpose.msra.mxu0 %v314
        %v316 = vand.u32 %v176, 4294901760
        %v317 = vsub.f32 %v176, %v316
        %318 = vmatpush.xpose.msra.mxu0 %v317
        %v319 = vand.u32 %v173, 4294901760
        %v320 = vsub.f32 %v173, %v319
        %321 = vmatpush.xpose.msra.mxu0 %v320
        %v322 = vand.u32 %v170, 4294901760
        %v323 = vsub.f32 %v170, %v322
        %324 = vmatmul.f32.gmra.mxu0 %v323
        %v325 = vpop.f32.mrf.mxu0
        %v326 = vadd.f32 %v288, %v325
        %327 = vdwg.mxu0
        %328 = vmatpush.xpose.msra.mxu0 0.0
        %329 = vmatpush.xpose.msra.mxu0 0.0
        %330 = vmatpush.xpose.msra.mxu0 0.0
        %331 = vmatpush.xpose.msra.mxu0 0.0
        %332 = vmatpush.xpose.msra.mxu0 0.0
        %333 = vmatpush.xpose.msra.mxu0 0.0
        %334 = vmatpush.xpose.msra.mxu0 0.0
        %335 = vmatpush.xpose.msra.mxu0 0.0
        %v336 = vand.u32 %v194, 4294901760
        %337 = vmatpush.xpose.msra.mxu0 %v336
        %v338 = vand.u32 %v191, 4294901760
        %339 = vmatpush.xpose.msra.mxu0 %v338
        %v340 = vand.u32 %v188, 4294901760
        %341 = vmatpush.xpose.msra.mxu0 %v340
        %v342 = vand.u32 %v185, 4294901760
        %343 = vmatpush.xpose.msra.mxu0 %v342
        %v344 = vand.u32 %v182, 4294901760
        %345 = vmatpush.xpose.msra.mxu0 %v344
        %v346 = vand.u32 %v179, 4294901760
        %347 = vmatpush.xpose.msra.mxu0 %v346
        %v348 = vand.u32 %v176, 4294901760
        %349 = vmatpush.xpose.msra.mxu0 %v348
        %v350 = vand.u32 %v173, 4294901760
        %351 = vmatpush.xpose.msra.mxu0 %v350
        %v352 = vand.u32 %v170, 4294901760
        %v353 = vsub.f32 %v170, %v352
        %v354 = vand.u32 %v353, 4294901760
        %355 = vmatmul.f32.gmra.mxu0 %v354
        %v356 = vpop.f32.mrf.mxu0
        %v357 = vadd.f32 %v326, %v356
        %358 = vdwg.mxu0
        %359 = vmatpush.xpose.msra.mxu0 0.0
        %360 = vmatpush.xpose.msra.mxu0 0.0
        %361 = vmatpush.xpose.msra.mxu0 0.0
        %362 = vmatpush.xpose.msra.mxu0 0.0
        %363 = vmatpush.xpose.msra.mxu0 0.0
        %364 = vmatpush.xpose.msra.mxu0 0.0
        %365 = vmatpush.xpose.msra.mxu0 0.0
        %366 = vmatpush.xpose.msra.mxu0 0.0
        %v367 = vand.u32 %v194, 4294901760
        %v368 = vsub.f32 %v194, %v367
        %v369 = vand.u32 %v368, 4294901760
        %370 = vmatpush.xpose.msra.mxu0 %v369
        %v371 = vand.u32 %v191, 4294901760
        %v372 = vsub.f32 %v191, %v371
        %v373 = vand.u32 %v372, 4294901760
        %374 = vmatpush.xpose.msra.mxu0 %v373
        %v375 = vand.u32 %v188, 4294901760
        %v376 = vsub.f32 %v188, %v375
        %v377 = vand.u32 %v376, 4294901760
        %378 = vmatpush.xpose.msra.mxu0 %v377
        %v379 = vand.u32 %v185, 4294901760
        %v380 = vsub.f32 %v185, %v379
        %v381 = vand.u32 %v380, 4294901760
        %382 = vmatpush.xpose.msra.mxu0 %v381
        %v383 = vand.u32 %v182, 4294901760
        %v384 = vsub.f32 %v182, %v383
        %v385 = vand.u32 %v384, 4294901760
        %386 = vmatpush.xpose.msra.mxu0 %v385
        %v387 = vand.u32 %v179, 4294901760
        %v388 = vsub.f32 %v179, %v387
        %v389 = vand.u32 %v388, 4294901760
        %390 = vmatpush.xpose.msra.mxu0 %v389
        %v391 = vand.u32 %v176, 4294901760
        %v392 = vsub.f32 %v176, %v391
        %v393 = vand.u32 %v392, 4294901760
        %394 = vmatpush.xpose.msra.mxu0 %v393
        %v395 = vand.u32 %v173, 4294901760
        %v396 = vsub.f32 %v173, %v395
        %v397 = vand.u32 %v396, 4294901760
        %398 = vmatpush.xpose.msra.mxu0 %v397
        %v399 = vand.u32 %v170, 4294901760
        %400 = vmatmul.f32.gmra.mxu0 %v399
        %v401 = vpop.f32.mrf.mxu0
        %v402 = vadd.f32 %v357, %v401
        %403 = vdwg.mxu0
        %404 = vmatpush.xpose.msra.mxu0 0.0
        %405 = vmatpush.xpose.msra.mxu0 0.0
        %406 = vmatpush.xpose.msra.mxu0 0.0
        %407 = vmatpush.xpose.msra.mxu0 0.0
        %408 = vmatpush.xpose.msra.mxu0 0.0
        %409 = vmatpush.xpose.msra.mxu0 0.0
        %410 = vmatpush.xpose.msra.mxu0 0.0
        %411 = vmatpush.xpose.msra.mxu0 0.0
        %v412 = vand.u32 %v194, 4294901760
        %413 = vmatpush.xpose.msra.mxu0 %v412
        %v414 = vand.u32 %v191, 4294901760
        %415 = vmatpush.xpose.msra.mxu0 %v414
        %v416 = vand.u32 %v188, 4294901760
        %417 = vmatpush.xpose.msra.mxu0 %v416
        %v418 = vand.u32 %v185, 4294901760
        %419 = vmatpush.xpose.msra.mxu0 %v418
        %v420 = vand.u32 %v182, 4294901760
        %421 = vmatpush.xpose.msra.mxu0 %v420
        %v422 = vand.u32 %v179, 4294901760
        %423 = vmatpush.xpose.msra.mxu0 %v422
        %v424 = vand.u32 %v176, 4294901760
        %425 = vmatpush.xpose.msra.mxu0 %v424
        %v426 = vand.u32 %v173, 4294901760
        %427 = vmatpush.xpose.msra.mxu0 %v426
        %v428 = vand.u32 %v170, 4294901760
        %429 = vmatmul.f32.gmra.mxu0 %v428
        %v430 = vpop.f32.mrf.mxu0
        %v431 = vadd.f32 %v402, %v430
        %432 = vdwg.mxu0
        %v433 = vmul.f32 %v159, %v159
        %v434 = vmul.f32 %v160, %v160
        %v435 = vmul.f32 %v161, %v161
        %v436 = vmul.f32 %v162, %v162
        %v437 = vmul.f32 %v163, %v163
        %v438 = vmul.f32 %v164, %v164
        %v439 = vmul.f32 %v165, %v165
        %v440 = vmul.f32 %v166, %v166
        %v441 = vsel %vm168, %v433, 0.0
        %442 = vadd.xlane.f32.xlu0 %v441
        %v443 = vpop.xlane.xlu0 %442
        %v444 = vsel %vm168, %v434, 0.0
        %445 = vadd.xlane.f32.xlu0 %v444
        %v446 = vpop.xlane.xlu0 %445
        %v447 = vsel %vm168, %v435, 0.0
        %448 = vadd.xlane.f32.xlu0 %v447
        %v449 = vpop.xlane.xlu0 %448
        %v450 = vsel %vm168, %v436, 0.0
        %451 = vadd.xlane.f32.xlu0 %v450
        %v452 = vpop.xlane.xlu0 %451
        %v453 = vsel %vm168, %v437, 0.0
        %454 = vadd.xlane.f32.xlu0 %v453
        %v455 = vpop.xlane.xlu0 %454
        %v456 = vsel %vm168, %v438, 0.0
        %457 = vadd.xlane.f32.xlu0 %v456
        %v458 = vpop.xlane.xlu0 %457
        %v459 = vsel %vm168, %v439, 0.0
        %460 = vadd.xlane.f32.xlu0 %v459
        %v461 = vpop.xlane.xlu0 %460
        %v462 = vsel %vm168, %v440, 0.0
        %463 = vadd.xlane.f32.xlu0 %v462
        %v464 = vpop.xlane.xlu0 %463
        %v465 = vmul.f32 %v167, %v167
        %vm466 = vcmask 257024
        %v467 = vsel %vm466, %v465, 0.0
        %468 = vadd.xlane.f32.xlu0 %v467
        %v469 = vpop.xlane.xlu0 %468
        %v478 = vlaneseq
        %v479 = vand.u32 %v478, 127
        %v480 = vperm.slane %v443, %v479
        %v481 = vadd.s32 %v479, 4294967288
        %v482 = vperm.slane %v446, %v481
        %vm483 = vcmask 130112
        %v484 = vsel %vm483, %v482, %v480
        %v485 = vadd.s32 %v479, 4294967280
        %v486 = vperm.slane %v449, %v485
        %vm487 = vcmask 195712
        %v488 = vsel %vm487, %v486, %v484
        %v489 = vadd.s32 %v479, 4294967272
        %v490 = vperm.slane %v452, %v489
        %vm491 = vcmask 261312
        %v492 = vsel %vm491, %v490, %v488
        %v493 = vadd.s32 %v479, 4294967264
        %v494 = vperm.slane %v455, %v493
        %vm495 = vcmask 326912
        %v496 = vsel %vm495, %v494, %v492
        %v497 = vadd.s32 %v479, 4294967256
        %v498 = vperm.slane %v458, %v497
        %vm499 = vcmask 392512
        %v500 = vsel %vm499, %v498, %v496
        %v501 = vadd.s32 %v479, 4294967248
        %v502 = vperm.slane %v461, %v501
        %vm503 = vcmask 458112
        %v504 = vsel %vm503, %v502, %v500
        %v505 = vadd.s32 %v479, 4294967240
        %v506 = vperm.slane %v464, %v505
        %vm507 = vcmask 523712
        %v508 = vsel %vm507, %v506, %v504
        %vm509 = vcmask 1042434
        %v510 = vsel %vm509, %v508, %v508
        %vm511 = vcmask 1043459
        %v512 = vsel %vm511, %v508, %v510
        %v514 = vadd.f32 %v469, %v512
        %v515 = vmul.f32 %v431, 2.0
        %v516 = vsub.f32 %v514, %v515
        %s517 = smul.u32 %s14, 64
        %v518 = vstv %s517
        %v519 = vadd.s32 %v518, %v479
        %vm520 = vcmp.lt.s32.totalorder %v519, 200
        %v521 = vsel %vm520, 1, 0
        %vm522 = vcmp.eq.s32.totalorder %v521, 1
        %v523 = vsel %vm522, %v516, 1.0
        %v524 = vrcp.pop %v523
        %v525 = vmul.f32 %v523, %v524
        %v526 = vsub.f32 1.0, %v525
        %v527 = vmul.f32 %v524, %v526
        %v528 = vadd.f32 %v524, %v527
        %vm529 = vweird.f32 %v523
        %vm530 = vweird.f32 %v524
        %vm531 = vmor %vm529, %vm530
        %v532 = vsel %vm531, %v524, %v528
        %v533 = vand.u32 2147483647, %v523
        %vm534 = vcmp.eq.f32.partialorder %v533, 8.507059e+37
        %v535 = vand.u32 %v523, 2147483648
        %v536 = vor.u32 1.1754944e-38, %v535
        %v537 = vsel %vm534, %v536, %v532
        %v538 = vmul.f32 1.0, %v537
        %vm539 = vcmask 519168
        %v540 = vsel %vm539, %v538, -inf
        %v541 = vrot.slane %v540, 4
        %v542 = vmax.f32 %v540, %v541
        %v543 = vrot.slane %v542, 2
        %v544 = vmax.f32 %v542, %v543
        %v545 = vrot.slane %v544, 1
        %v546 = vmax.f32 %v544, %v545
        %v547 = vsub.f32 %v538, %v546
        %v548 = vmul.f32 %v547, 1.442695
        %v549 = vpow.pop %v548
        %v550 = vsel %vm539, %v549, 0.0
        %v551 = vrot.slane %v550, 4
        %v552 = vadd.f32 %v550, %v551
        %v553 = vrot.slane %v552, 2
        %v554 = vadd.f32 %v552, %v553
        %v555 = vrot.slane %v554, 1
        %v556 = vadd.f32 %v554, %v555
        %v557 = vrcp.pop %v556
        %v558 = vmul.f32 %v549, %v557
        %v559 = vlaneseq
        %v560 = vshrl.u32 %v559, 7
        %vm561 = vcmp.ge.f32.partialorder %v538, %v546
        %v562 = vsel %vm561, %v560, 4
        %v563 = vsel %vm539, %v562, 2147483647
        %v564 = vrot.slane %v563, 4
        %vm565 = vcmp.lt.s32.totalorder %v563, %v564
        %v566 = vsel %vm565, %v563, %v564
        %v567 = vrot.slane %v566, 2
        %vm568 = vcmp.lt.s32.totalorder %v566, %v567
        %v569 = vsel %vm568, %v566, %v567
        %v570 = vrot.slane %v569, 1
        %vm571 = vcmp.lt.s32.totalorder %v569, %v570
        %v572 = vsel %vm571, %v569, %v570
        %vm573 = vcmp.eq.s32.totalorder %v560, %v572
        %v574 = vsel %vm522, %v558, 0.0
        %vm575 = vmand %vm522, %vm573
        %v576 = vsel %vm575, %v523, 0.0
        %v577 = vld [vmem:[#allocation2] sm:$0xf]
        %v578 = vsel %vm539, %v574, 0.0
        %579 = vadd.xlane.f32.xlu0 %v578
        %v580 = vpop.xlane.xlu0 %579
        %v581 = vadd.f32 %v577, %v580
        %vm582 = vcmask 3072
        %583 = vst.msk [vmem:[#allocation2] sm:$0xf] %vm582, %v581
        %v584 = vld [vmem:[#allocation3] sm:$0xf]
        %v585 = vsel %vm539, %v576, 0.0
        %586 = vadd.xlane.f32.xlu0 %v585
        %v587 = vpop.xlane.xlu0 %586
        %v588 = vadd.f32 %v584, %v587
        %589 = vst.msk [vmem:[#allocation3] sm:$0xf] %vm582, %v588
        %p590 = scmp.eq.s32.totalorder %s14, 3
        // Predicated region
        $region33: #{tpu_custom_call.1} parent=27 // pred_check
          %p591 = pneg %p590
        $region34: #{tpu_custom_call.1} parent=27 // pred_check_branch
          %593 = sbr.rel (%p591) target = $region36
        $region35: #{tpu_custom_call.1} parent=27 // pred_region
          %v594 = vld [vmem:[#allocation2] sm:$0xf]
          %v595 = vmul.f32 %v594, 0.005
          %v596 = vadd.f32 %v595, 1e-07
          %v597 = vlog2.pop %v596
          %v598 = vmul.f32 %v597, 0.6931472
          %v599 = vmul.f32 %v595, %v598
          %v600 = vsel %vm582, %v599, 0.0
          %601 = vadd.xlane.f32.xlu0 %v600
          %v602 = vpop.xlane.xlu0 %601
          %v603 = vrot.slane %v602, 4
          %v604 = vadd.f32 %v602, %v603
          %v605 = vrot.slane %v604, 2
          %v606 = vadd.f32 %v604, %v605
          %v607 = vrot.slane %v606, 1
          %v608 = vadd.f32 %v606, %v607
          %s609 = vtos %v608
          %s610 = ssub.f32 0.0, %s609
          %v611 = vld [vmem:[#allocation3] sm:$0xf]
          %v612 = vsel %vm582, %v611, 0.0
          %613 = vadd.xlane.f32.xlu0 %v612
          %v614 = vpop.xlane.xlu0 %613
          %v615 = vrot.slane %v614, 4
          %v616 = vadd.f32 %v614, %v615
          %v617 = vrot.slane %v616, 2
          %v618 = vadd.f32 %v616, %v617
          %v619 = vrot.slane %v618, 1
          %v620 = vadd.f32 %v618, %v619
          %s621 = vtos %v620
          %s622 = scalar_lea.smem [#allocation4], 0
          %623 = sst [smem:[%s622]] %s621
          %s624 = scalar_lea.smem [#allocation4], 1
          %625 = sst [smem:[%s624]] %s610
        $region36: #{tpu_custom_call.1} parent=27 // pred_fallthru
          _
        // Predicated region
        $region37: #{tpu_custom_call.1} parent=27 // pred_check
          %p626 = pneg %p74
        $region38: #{tpu_custom_call.1} parent=27 // pred_check_branch
          %628 = sbr.rel (%p626) target = $region40
        $region39: #{tpu_custom_call.1} parent=27 // pred_region
          %630 = vsyncadd [#allocation5], 0
          %s632 = sshll.u32 %s2, 4
          %s633 = int_to_ptr.hbm [resolvable:$true] %s632
          %635 = dma.smem_to_hbm [#allocation4], 16, %s633, [#allocation5]
        $region40: #{tpu_custom_call.1} parent=27 // pred_fallthru
          _
        // Predicated region
        $region41: #{tpu_custom_call.1} parent=27 // pred_check
          %p636 = pneg %p74
        $region42: #{tpu_custom_call.1} parent=27 // pred_check_branch
          %638 = sbr.rel (%p636) target = $region44
        $region43: #{tpu_custom_call.1} parent=27 // pred_region
          %640 = dma.done [#allocation5], 16
        $region44: #{tpu_custom_call.1} parent=27 // pred_fallthru
          _
        %641 = sfence
      $region28: #{tpu_custom_call.1} parent=5 // pred_fallthru
        _
      %p642 = scmp.le.s32.totalorder 2, %s9
      // Predicated region
      $region45: #{tpu_custom_call.1} parent=5 // pred_check
        %p643 = pneg %p642
      $region46: #{tpu_custom_call.1} parent=5 // pred_check_branch
        %645 = sbr.rel (%p643) target = $region48
      $region47: #{tpu_custom_call.1} parent=5 // pred_region
        %s646 = ssub.s32 %s9, 2
      $region48: #{tpu_custom_call.1} parent=5 // pred_fallthru
        _
    $region6: #{tpu_custom_call.1} parent=1 // loop_footer
      %s13 = sadd.s32 1, %s9
    $region7: #{tpu_custom_call.1} parent=1 // loop_footer_branch
      %8 = sbr.rel target = $region3
    $region8: #{tpu_custom_call.1} parent=1 // loop_exit
      _
    %647 = vsyncpa [#allocation5], 1
    %s648 = scalar_lea.sflag [#allocation5], 1
    %649 = vsyncpa %s648, 1

</llo_original>
